<compile_context>
chip_gen: v5e
topology: v5e:2x2
jax: 0.10.0
libtpu: 0.0.40
codegen_flags: <defaults>
</compile_context>

<pallas_src>
import functools

import jax
import jax.numpy as jnp
from jax.experimental import pallas as pl
from jax.experimental.pallas import tpu as pltpu


def _attention_auto_kernel(w_ref, x_ref, o_ref):
    # w_ref : (1,) SMEM scalar = conv_weight / C  (channel-mean 1/C folded in)
    # x_ref : (TN, C*S) VMEM block -- row n is [chan0 spatial | chan1 | ...]
    # o_ref : (TN, C)   VMEM block
    C = o_ref.shape[-1]
    S = x_ref.shape[-1] // C
    w = w_ref[0]

    # Channel reduction of x^2 via static, vreg-aligned lane slices.
    # All intermediates are (TN, S)-sized.
    f = None
    for c in range(C):
        xc = x_ref[:, c * S:(c + 1) * S]
        sq = xc * xc
        f = sq if f is None else f + sq
    f = f * w  # conv 1x1 weight; bias dropped (softmax shift-invariant)

    # Spatial softmax.  Exact divide (kernel is HBM-bound; EUP has slack).
    f = f - jnp.max(f, axis=-1, keepdims=True)
    e = jnp.exp(f)
    a = e / jnp.sum(e, axis=-1, keepdims=True)

    # Per-channel weighted spatial sum; again only (TN, S) temporaries.
    outs = [jnp.sum(a * x_ref[:, c * S:(c + 1) * S], axis=-1, keepdims=True)
            for c in range(C)]
    o_ref[...] = jnp.concatenate(outs, axis=-1).astype(o_ref.dtype)


def _pick_tile(n, row_bytes):
    """Samples (rows) per grid step.  Static python ints.

    Returns either n (single block, block dims == array dims) or a multiple of
    8, preferring an exact divisor of n so no ragged final block is needed.
    Per-block budget ~2 MiB -> double-buffered input + (TN, S) temporaries fit
    v5e's 16 MiB default scoped VMEM and v7x's 64 MiB physical VMEM.
    """
    cap_bytes = 2 * 1024 * 1024
    cap = max(8, ((cap_bytes // max(1, row_bytes)) // 8) * 8)
    if n <= 16 and n * row_bytes <= cap_bytes:
        return n  # tiny problem: one block (dims equal full array dims)
    # Aim for >= 2 grid steps (v7x has 2 TensorCores) within the byte cap.
    target = min(cap, max(8, ((((n + 1) // 2) + 7) // 8) * 8))
    # Prefer an exact multiple-of-8 divisor of n at or just below the target.
    for cand in range(target, 7, -8):
        if n % cand == 0 and cand >= max(8, target // 2):
            return cand
    return target  # ragged final block (rows are independent; OOB rows masked)


@functools.partial(jax.jit, static_argnames=("sequence", "img_dim", "kernel_size"))
def attention_auto_forward(x, conv_w, conv_b, *, sequence, img_dim, kernel_size):
    """x: (N, C, H, W) float32 (NCHW, like the PyTorch module).
    conv_w: (1, 1, 1, 1), conv_b: (1,).  Returns (-1, sequence, img_dim)."""
    N, C, H, W = x.shape
    S = H * W
    CS = C * S
    # Flat sample-major layout: one contiguous HBM row per sample.
    x_flat = x.reshape(N, CS).astype(jnp.float32)

    tn = _pick_tile(N, CS * 4)
    grid = pl.cdiv(N, tn)

    # Fold the channel-mean's 1/C into the conv weight; drop the bias (adding
    # a constant before a spatial softmax cannot change the output).
    w_scaled = (conv_w.reshape(1) / jnp.float32(C)).astype(jnp.float32)
    del conv_b

    cost = pl.CostEstimate(
        flops=6 * N * C * S,
        transcendentals=N * S,
        bytes_accessed=N * CS * 4 + N * C * 4,
    )

    out = pl.pallas_call(
        _attention_auto_kernel,
        out_shape=jax.ShapeDtypeStruct((N, C), jnp.float32),
        grid_spec=pltpu.PrefetchScalarGridSpec(
            num_scalar_prefetch=0,
            grid=(grid,),
            in_specs=[
                pl.BlockSpec(memory_space=pltpu.MemorySpace.SMEM),  # conv_w / C
                pl.BlockSpec((tn, CS), lambda n: (n, 0)),           # contiguous DMA
            ],
            out_specs=pl.BlockSpec((tn, C), lambda n: (n, 0)),
        ),
        compiler_params=pltpu.CompilerParams(
            dimension_semantics=("parallel",),
            vmem_limit_bytes=32 * 1024 * 1024,
        ),
        cost_estimate=cost,
    )(w_scaled, x_flat)

    return out.reshape(-1, sequence, img_dim)


def _reference_forward(x, conv_w, conv_b, *, sequence, img_dim, kernel_size):
    # Pure-JAX reference mirroring the PyTorch code.
    feature_pow = x ** 2
    feature_map = jnp.mean(feature_pow, axis=1).reshape(-1, 1, kernel_size, kernel_size)
    w0 = conv_w.reshape(())
    b0 = conv_b.reshape(())
    feature_map = (feature_map * w0 + b0).reshape(-1, kernel_size ** 2)
    feature_weight = jax.nn.softmax(feature_map, axis=-1).reshape(
        -1, 1, kernel_size, kernel_size)
    out_map = feature_weight * x
    output = jnp.sum(jnp.sum(out_map, axis=3), axis=2)
    return output.reshape(-1, sequence, img_dim)


def _run_case(key, batch, sequence, img_dim, kernel_size):
    kx, kw, kb = jax.random.split(key, 3)
    x = jax.random.normal(
        kx, (batch * sequence, img_dim, kernel_size, kernel_size), dtype=jnp.float32)
    conv_w = jax.random.normal(kw, (1, 1, 1, 1), dtype=jnp.float32)
    conv_b = jax.random.normal(kb, (1,), dtype=jnp.float32)

    out = attention_auto_forward(
        x, conv_w, conv_b,
        sequence=sequence, img_dim=img_dim, kernel_size=kernel_size)
    out = jax.block_until_ready(out)

    ref = _reference_forward(
        x, conv_w, conv_b,
        sequence=sequence, img_dim=img_dim, kernel_size=kernel_size)

    assert out.shape == (batch, sequence, img_dim), out.shape
    err = jnp.max(jnp.abs(out - ref))
    assert jnp.allclose(out, ref, atol=1e-4, rtol=1e-4), f"max abs err {err}"


if __name__ == "__main__":
    key = jax.random.PRNGKey(0)
    k1, k2, k3 = jax.random.split(key, 3)

    # Small shapes consistent with the module:
    #   x: (batch*sequence, img_dim, kernel_size, kernel_size)
    _run_case(k1, batch=2, sequence=4, img_dim=4, kernel_size=16)

    # Larger case: N = 320 -> tn = 160 (exact divisor), 2 grid steps, no padding.
    _run_case(k2, batch=64, sequence=5, img_dim=4, kernel_size=16)

    # Ragged case: N = 21 -> tn = 16, 2 grid steps, ragged final block.
    _run_case(k3, batch=3, sequence=7, img_dim=4, kernel_size=16)

    print("KERNEL_OK")
</pallas_src>

<mosaic_0001>
module attributes {stable_mosaic.version = 11 : i64} {
  func.func @_attention_auto_kernel(%arg0: i32, %arg1: memref<1xf32, #tpu.memory_space<smem>>, %arg2: memref<8x1024xf32, #tpu.memory_space<vmem>>, %arg3: memref<8x4xf32, #tpu.memory_space<vmem>>) attributes {dimension_semantics = [#tpu.dimension_semantics<parallel>], iteration_bounds = array<i64: 1>, scalar_prefetch = 0 : i64, scratch_operands = 0 : i64, tpu.core_type = #tpu.core_type<tc>, window_params = [{transform_indices = @transform_0, window_bounds = array<i64: 1>}, {transform_indices = @transform_1, window_bounds = array<i64: 8, 1024>}, {transform_indices = @transform_2, window_bounds = array<i64: 8, 4>}]} {
    %c0 = arith.constant 0 : index
    %0 = memref.load %arg1[%c0] : memref<1xf32, #tpu.memory_space<smem>>
    %c0_0 = arith.constant 0 : index
    %c0_1 = arith.constant 0 : index
    %1 = vector.load %arg2[%c0_0, %c0_1] : memref<8x1024xf32, #tpu.memory_space<vmem>>, vector<8x256xf32>
    %2 = arith.mulf %1, %1 : vector<8x256xf32>
    %c0_2 = arith.constant 0 : index
    %c256 = arith.constant 256 : index
    %3 = vector.load %arg2[%c0_2, %c256] : memref<8x1024xf32, #tpu.memory_space<vmem>>, vector<8x256xf32>
    %4 = arith.mulf %3, %3 : vector<8x256xf32>
    %5 = arith.addf %2, %4 : vector<8x256xf32>
    %c0_3 = arith.constant 0 : index
    %c512 = arith.constant 512 : index
    %6 = vector.load %arg2[%c0_3, %c512] : memref<8x1024xf32, #tpu.memory_space<vmem>>, vector<8x256xf32>
    %7 = arith.mulf %6, %6 : vector<8x256xf32>
    %8 = arith.addf %5, %7 : vector<8x256xf32>
    %c0_4 = arith.constant 0 : index
    %c768 = arith.constant 768 : index
    %9 = vector.load %arg2[%c0_4, %c768] : memref<8x1024xf32, #tpu.memory_space<vmem>>, vector<8x256xf32>
    %10 = arith.mulf %9, %9 : vector<8x256xf32>
    %11 = arith.addf %8, %10 : vector<8x256xf32>
    %12 = vector.broadcast %0 : f32 to vector<8x256xf32>
    %13 = arith.mulf %11, %12 : vector<8x256xf32>
    %cst = arith.constant dense<0xFF800000> : vector<8xf32>
    %14 = vector.multi_reduction <maximumf>, %13, %cst [1] : vector<8x256xf32> to vector<8xf32>
    %15 = vector.shape_cast %14 : vector<8xf32> to vector<8x1xf32>
    %16 = vector.broadcast %15 : vector<8x1xf32> to vector<8x256xf32>
    %17 = arith.subf %13, %16 : vector<8x256xf32>
    %18 = math.exp %17 : vector<8x256xf32>
    %cst_5 = arith.constant dense<0.000000e+00> : vector<8xf32>
    %19 = vector.multi_reduction <add>, %18, %cst_5 [1] : vector<8x256xf32> to vector<8xf32>
    %20 = vector.shape_cast %19 : vector<8xf32> to vector<8x1xf32>
    %21 = vector.broadcast %20 : vector<8x1xf32> to vector<8x256xf32>
    %22 = arith.divf %18, %21 : vector<8x256xf32>
    %c0_6 = arith.constant 0 : index
    %c0_7 = arith.constant 0 : index
    %23 = vector.load %arg2[%c0_6, %c0_7] : memref<8x1024xf32, #tpu.memory_space<vmem>>, vector<8x256xf32>
    %24 = arith.mulf %22, %23 : vector<8x256xf32>
    %cst_8 = arith.constant dense<0.000000e+00> : vector<8xf32>
    %25 = vector.multi_reduction <add>, %24, %cst_8 [1] : vector<8x256xf32> to vector<8xf32>
    %26 = vector.shape_cast %25 : vector<8xf32> to vector<8x1xf32>
    %c0_9 = arith.constant 0 : index
    %c256_10 = arith.constant 256 : index
    %27 = vector.load %arg2[%c0_9, %c256_10] : memref<8x1024xf32, #tpu.memory_space<vmem>>, vector<8x256xf32>
    %28 = arith.mulf %22, %27 : vector<8x256xf32>
    %cst_11 = arith.constant dense<0.000000e+00> : vector<8xf32>
    %29 = vector.multi_reduction <add>, %28, %cst_11 [1] : vector<8x256xf32> to vector<8xf32>
    %30 = vector.shape_cast %29 : vector<8xf32> to vector<8x1xf32>
    %c0_12 = arith.constant 0 : index
    %c512_13 = arith.constant 512 : index
    %31 = vector.load %arg2[%c0_12, %c512_13] : memref<8x1024xf32, #tpu.memory_space<vmem>>, vector<8x256xf32>
    %32 = arith.mulf %22, %31 : vector<8x256xf32>
    %cst_14 = arith.constant dense<0.000000e+00> : vector<8xf32>
    %33 = vector.multi_reduction <add>, %32, %cst_14 [1] : vector<8x256xf32> to vector<8xf32>
    %34 = vector.shape_cast %33 : vector<8xf32> to vector<8x1xf32>
    %c0_15 = arith.constant 0 : index
    %c768_16 = arith.constant 768 : index
    %35 = vector.load %arg2[%c0_15, %c768_16] : memref<8x1024xf32, #tpu.memory_space<vmem>>, vector<8x256xf32>
    %36 = arith.mulf %22, %35 : vector<8x256xf32>
    %cst_17 = arith.constant dense<0.000000e+00> : vector<8xf32>
    %37 = vector.multi_reduction <add>, %36, %cst_17 [1] : vector<8x256xf32> to vector<8xf32>
    %38 = vector.shape_cast %37 : vector<8xf32> to vector<8x1xf32>
    %39 = tpu.concatenate %26, %30, %34, %38 in 1 : vector<8x1xf32>, vector<8x1xf32>, vector<8x1xf32>, vector<8x1xf32> -> vector<8x4xf32>
    %c0_18 = arith.constant 0 : index
    %c0_19 = arith.constant 0 : index
    %40 = vector.load %arg3[%c0_18, %c0_19] : memref<8x4xf32, #tpu.memory_space<vmem>>, vector<8x4xf32>
    tpu.vector_store %arg3[%c0_18, %c0_19], %39 {strides = array<i32>} : memref<8x4xf32, #tpu.memory_space<vmem>>, vector<8x4xf32>,
    return
  }
  func.func @transform_0(%arg0: i32) -> i32 {
    %c0_i32 = arith.constant 0 : i32
    %c0_i32_0 = arith.constant 0 : i32
    return %c0_i32 : i32
  }
  func.func @transform_1(%arg0: i32) -> (i32, i32) {
    %c0_i32 = arith.constant 0 : i32
    %c0_i32_0 = arith.constant 0 : i32
    return %arg0, %c0_i32 : i32, i32
  }
  func.func @transform_2(%arg0: i32) -> (i32, i32) {
    %c0_i32 = arith.constant 0 : i32
    %c0_i32_0 = arith.constant 0 : i32
    return %arg0, %c0_i32 : i32, i32
  }
}

</mosaic_0001>

<llo_original>
// kernel: attention_auto_forward.1
$region0: #{attention_auto_forward.1}
  #allocation0 [shape = 'u32[]', space=smem, size = 0x4, offset = 0x4, fixed_abs, tag = 'smem constant byte address 0x4 - core index']
  #allocation1 [shape = 'u32[72,128]{1,0:T(1,128)}', space=vmem, size = 0x9000, scoped, tag = 'internal scratch']
  #allocation2 [shape = 'f32[1]{0:T(128)S(6)}', space=smem, size = 0x200, scoped, tag = 'scoped memory for attention_auto_forward.1']
  %s0 = inlined_call_operand.<no memory space> [shape: f32[1], index: 0, kind: input, shape index: {}]
  %s1 = inlined_call_operand.vmem [shape: f32[8,1024], index: 1, kind: input, shape index: {}]
  %s2 = inlined_call_operand.hbm [shape: f32[8,4], index: 2, kind: output, shape index: {}]
  %s3 = sld [smem:[#allocation0]]
  $region18: #{attention_auto_forward.1} parent=0
    _
  %s5 = ssub.s32 1, %s3
  %s6 = scalar_select 0, %s5, %s3
  %7 = sst [smem:[#allocation2]] %s0
  $region1: #{attention_auto_forward.1} parent=0
    #allocation3 [shape = 'u8[4096]{0}', space=vmem, size = 0x1000, scoped, tag = 'output window, operand 0, single buffered']
    #allocation4 [shape = 's32[1]{0}', space=sflag, size = 0x4, scoped, tag = 'scoped memory for attention_auto_forward.1']
    %8 = vsyncpa [#allocation4], 0
    // Predicated region
    $region2: #{attention_auto_forward.1} parent=1 // pred_check
      _
    $region3: #{attention_auto_forward.1} parent=1 // pred_check_branch
      %10 = sbr.rel (0) target = $region5
    $region4: #{attention_auto_forward.1} parent=1 // pred_region
      _
    $region5: #{attention_auto_forward.1} parent=1 // pred_fallthru
      _
    // Predicated region
    $region6: #{attention_auto_forward.1} parent=1 // pred_check
      _
    $region7: #{attention_auto_forward.1} parent=1 // pred_check_branch
      %12 = sbr.rel (0) target = $region9
    $region8: #{attention_auto_forward.1} parent=1 // pred_region
      _
    $region9: #{attention_auto_forward.1} parent=1 // pred_fallthru
      _
    %s13 = sld [smem:[#allocation2]]
    %v14 = vld [vmem:[%s1] sm:$0xff]
    %v15 = vld [vmem:[%s1 + $0x8] sm:$0xff]
    %v16 = vmul.f32 %v14, %v14
    %v17 = vmul.f32 %v15, %v15
    %v18 = vld [vmem:[%s1 + $0x10] sm:$0xff]
    %v19 = vld [vmem:[%s1 + $0x18] sm:$0xff]
    %v20 = vmul.f32 %v18, %v18
    %v21 = vmul.f32 %v19, %v19
    %v22 = vadd.f32 %v16, %v20
    %v23 = vadd.f32 %v17, %v21
    %v24 = vld [vmem:[%s1 + $0x20] sm:$0xff]
    %v25 = vld [vmem:[%s1 + $0x28] sm:$0xff]
    %v26 = vmul.f32 %v24, %v24
    %v27 = vmul.f32 %v25, %v25
    %v28 = vadd.f32 %v22, %v26
    %v29 = vadd.f32 %v23, %v27
    %v30 = vld [vmem:[%s1 + $0x30] sm:$0xff]
    %v31 = vld [vmem:[%s1 + $0x38] sm:$0xff]
    %v32 = vmul.f32 %v30, %v30
    %v33 = vmul.f32 %v31, %v31
    %v34 = vadd.f32 %v28, %v32
    %v35 = vadd.f32 %v29, %v33
    %v36 = vstv %s13
    %v37 = vmul.f32 %v34, %v36
    %v38 = vmul.f32 %v35, %v36
    %v39 = vmax.f32 %v37, %v38
    %40 = vmax.xlane.f32.xlu0 %v39
    %v41 = vpop.xlane.xlu0 %40
    %v42 = vsub.f32 %v37, %v41
    %v43 = vsub.f32 %v38, %v41
    %v44 = vmul.f32 %v42, 1.442695
    %v45 = vpow.pop %v44
    %v46 = vmul.f32 %v43, 1.442695
    %v47 = vpow.pop %v46
    %v48 = vadd.f32 %v45, %v47
    %49 = vadd.xlane.f32.xlu0 %v48
    %v50 = vpop.xlane.xlu0 %49
    %v51 = vrcp.pop %v50
    %v52 = vmul.f32 %v50, %v51
    %v53 = vsub.f32 1.0, %v52
    %v54 = vmul.f32 %v51, %v53
    %v55 = vadd.f32 %v51, %v54
    %vm56 = vweird.f32 %v50
    %vm57 = vweird.f32 %v51
    %vm58 = vmor %vm56, %vm57
    %v59 = vsel %vm58, %v51, %v55
    %v60 = vand.u32 2147483647, %v50
    %vm61 = vcmp.eq.f32.partialorder %v60, 8.507059e+37
    %v62 = vand.u32 %v50, 2147483648
    %v63 = vor.u32 1.1754944e-38, %v62
    %v64 = vsel %vm61, %v63, %v59
    %v65 = vmul.f32 %v45, %v64
    %v66 = vmul.f32 %v47, %v64
    %v67 = vmul.f32 %v65, %v14
    %v68 = vmul.f32 %v66, %v15
    %v69 = vadd.f32 %v67, %v68
    %70 = vadd.xlane.f32.xlu0 %v69
    %v71 = vpop.xlane.xlu0 %70
    %v72 = vmul.f32 %v65, %v18
    %v73 = vmul.f32 %v66, %v19
    %v74 = vadd.f32 %v72, %v73
    %75 = vadd.xlane.f32.xlu0 %v74
    %v76 = vpop.xlane.xlu0 %75
    %v77 = vmul.f32 %v65, %v24
    %v78 = vmul.f32 %v66, %v25
    %v79 = vadd.f32 %v77, %v78
    %80 = vadd.xlane.f32.xlu0 %v79
    %v81 = vpop.xlane.xlu0 %80
    %v82 = vmul.f32 %v65, %v30
    %v83 = vmul.f32 %v66, %v31
    %v84 = vadd.f32 %v82, %v83
    %85 = vadd.xlane.f32.xlu0 %v84
    %v86 = vpop.xlane.xlu0 %85
    %vm87 = vcmask 7168
    %v88 = vsel %vm87, %v71, %v76
    %vm89 = vcmask 15360
    %v90 = vsel %vm89, %v88, %v81
    %vm91 = vcmask 23552
    %v92 = vsel %vm91, %v90, %v86
    %vm93 = vcmask 31744
    %94 = vst.msk [vmem:[#allocation3] sm:$0xff] %vm93, %v92
    // Predicated region
    $region10: #{attention_auto_forward.1} parent=1 // pred_check
      _
    $region11: #{attention_auto_forward.1} parent=1 // pred_check_branch
      %96 = sbr.rel (0) target = $region13
    $region12: #{attention_auto_forward.1} parent=1 // pred_region
      %98 = vsyncadd [#allocation4], 0
      %s100 = sshll.u32 [#allocation3], 4
      %s101 = int_to_ptr.vmem [resolvable:$true] %s100
      %s102 = sshll.u32 %s2, 4
      %s103 = int_to_ptr.hbm [resolvable:$true] %s102
      %105 = dma.vmem_to_hbm [thread:$0]  %s101, 128, %s103, [#allocation4]
    $region13: #{attention_auto_forward.1} parent=1 // pred_fallthru
      _
    // Predicated region
    $region14: #{attention_auto_forward.1} parent=1 // pred_check
      _
    $region15: #{attention_auto_forward.1} parent=1 // pred_check_branch
      %107 = sbr.rel (0) target = $region17
    $region16: #{attention_auto_forward.1} parent=1 // pred_region
      %109 = dma.done [#allocation4], 128
    $region17: #{attention_auto_forward.1} parent=1 // pred_fallthru
      _
    %110 = vsyncpa [#allocation4], 1

</llo_original>
